<compile_context>
chip_gen: v5e
topology: v5e:2x2
jax: 0.10.0
libtpu: 0.0.40
codegen_flags: <defaults>
</compile_context>

<pallas_src>
import functools

import jax
import jax.numpy as jnp
from jax.experimental import pallas as pl
from jax.experimental.pallas import tpu as pltpu


# ----------------------------------------------------------------------------
# Tile-size helper: largest multiple-of-`quantum` divisor of `dim` that is
# <= target; falls back to the full dim (valid full-array block) otherwise.
# ----------------------------------------------------------------------------
def _pick_tile(dim, target, quantum):
    if dim <= target:
        return dim
    t = (target // quantum) * quantum
    while t >= quantum:
        if dim % t == 0:
            return t
        t -= quantum
    return dim


# ----------------------------------------------------------------------------
# Kernel 1: tiled linear  y = x @ w + b   (bf16 MXU inputs, f32 accumulate)
# ----------------------------------------------------------------------------
def _linear_kernel(x_ref, w_ref, b_ref, o_ref):
    x = x_ref[...].astype(jnp.bfloat16)          # (tm, K)
    w = w_ref[...].astype(jnp.bfloat16)          # (K, tn)
    acc = jnp.dot(x, w, preferred_element_type=jnp.float32)
    o_ref[...] = acc + b_ref[...]                # bias broadcast (1, tn)


def pallas_linear(x, w, b, *, tm_target=512, tn_target=512):
    M, K = x.shape
    K2, Nout = w.shape
    assert K == K2
    # M tiles on sublane granularity (8), Nout tiles on lane granularity (128);
    # 512-wide tiles keep >=256-wide MXU feeds (v6e/v7x) and ~85% of HBM roofline.
    tm = _pick_tile(M, tm_target, 8)
    tn = _pick_tile(Nout, tn_target, 128)
    grid = (M // tm, Nout // tn)
    return pl.pallas_call(
        _linear_kernel,
        out_shape=jax.ShapeDtypeStruct((M, Nout), jnp.float32),
        grid_spec=pl.GridSpec(
            grid=grid,
            in_specs=[
                pl.BlockSpec((tm, K), lambda i, j: (i, 0)),
                pl.BlockSpec((K, tn), lambda i, j: (0, j)),
                pl.BlockSpec((1, tn), lambda i, j: (0, j)),
            ],
            out_specs=pl.BlockSpec((tm, tn), lambda i, j: (i, j)),
        ),
        compiler_params=pltpu.CompilerParams(
            dimension_semantics=("parallel", "parallel")),
        cost_estimate=pl.CostEstimate(
            flops=2 * M * K * Nout,
            transcendentals=0,
            bytes_accessed=4 * (M * K + K * Nout + M * Nout + Nout)),
    )(x, w, b.reshape(1, Nout))


# ----------------------------------------------------------------------------
# Kernel 2: attention for one batch row, all heads per grid step.
#   qkv_ref: (1, N, 3C) row-layout slice straight from the qkv projection.
#   ln_ref : (8, D) packed LayerNorm params (rows: q_gamma, q_beta, k_gamma, k_beta).
#   o_ref  : (1, N, C)    attention output, already in merged-head (B,N,C) layout.
#   attn_ref: (1, H, N, N) saved attention probabilities.
# ----------------------------------------------------------------------------
def _attn_kernel(qkv_ref, ln_ref, o_ref, attn_ref, *,
                 num_heads, head_dim, scale, eps):
    C = num_heads * head_dim
    qg = ln_ref[0:1, :]                          # (1, D)
    qb = ln_ref[1:2, :]
    kg = ln_ref[2:3, :]
    kb = ln_ref[3:4, :]

    def layer_norm(t, gamma, beta):              # f32 throughout
        mu = jnp.mean(t, axis=-1, keepdims=True)
        d = t - mu
        var = jnp.mean(d * d, axis=-1, keepdims=True)
        return d * jax.lax.rsqrt(var + eps) * gamma + beta

    outs = []
    for h in range(num_heads):                   # static unroll over heads
        lo = h * head_dim
        q = qkv_ref[0, :, lo:lo + head_dim]                  # (N, D)
        k = qkv_ref[0, :, C + lo:C + lo + head_dim]          # (N, D)
        v = qkv_ref[0, :, 2 * C + lo:2 * C + lo + head_dim]  # (N, D)

        q = layer_norm(q, qg, qb) * scale
        k = layer_norm(k, kg, kb)

        # bf16 MXU inputs, f32 accumulation
        s = jnp.dot(q.astype(jnp.bfloat16), k.astype(jnp.bfloat16).T,
                    preferred_element_type=jnp.float32)      # (N, N)
        m = jnp.max(s, axis=-1, keepdims=True)
        p = jnp.exp(s - m)
        p = p * pl.reciprocal(jnp.sum(p, axis=-1, keepdims=True), approx=True)

        attn_ref[0, h] = p                                   # saved_attn (dropout p=0)
        outs.append(jnp.dot(p.astype(jnp.bfloat16), v.astype(jnp.bfloat16),
                            preferred_element_type=jnp.float32))

    # One lane-dense (N, C) store (C is a multiple of 128 at real ViT widths).
    o_ref[0] = jnp.concatenate(outs, axis=-1)


def pallas_attention(qkv, ln_pack, *, num_heads, head_dim, scale, eps=1e-6):
    B, N, C3 = qkv.shape
    C = num_heads * head_dim
    assert C3 == 3 * C
    kernel = functools.partial(_attn_kernel, num_heads=num_heads,
                               head_dim=head_dim, scale=scale, eps=eps)
    attn_elems = B * num_heads * N * N
    out, attn = pl.pallas_call(
        kernel,
        out_shape=(
            jax.ShapeDtypeStruct((B, N, C), jnp.float32),
            jax.ShapeDtypeStruct((B, num_heads, N, N), jnp.float32),
        ),
        grid_spec=pl.GridSpec(
            grid=(B,),
            in_specs=[
                pl.BlockSpec((1, N, 3 * C), lambda b: (b, 0, 0)),
                pl.BlockSpec((8, head_dim), lambda b: (0, 0)),
            ],
            out_specs=(
                pl.BlockSpec((1, N, C), lambda b: (b, 0, 0)),
                pl.BlockSpec((1, num_heads, N, N), lambda b: (b, 0, 0, 0)),
            ),
        ),
        compiler_params=pltpu.CompilerParams(
            dimension_semantics=("parallel",)),      # shards batches across TCs (v7x)
        cost_estimate=pl.CostEstimate(
            flops=4 * attn_elems * head_dim,          # q@k^T and p@v
            transcendentals=attn_elems,               # exp
            bytes_accessed=4 * (B * N * 3 * C + B * N * C + attn_elems)),
    )(qkv, ln_pack)
    return out, attn


# ----------------------------------------------------------------------------
# Module-level wrapper: ExtractableAttentionWrapper.forward
# ----------------------------------------------------------------------------
def extractable_attention_forward(x, params, num_heads):
    """x: (B, N, C) float32.  Returns (out (B,N,C), saved_attn (B,H,N,N))."""
    B, N, C = x.shape
    head_dim = C // num_heads
    scale = head_dim ** -0.5

    # qkv projection (tiled Pallas matmul); keep the natural (B, N, 3C) row layout —
    # no HBM transpose, the attention kernel slices q/k/v/heads by lane offset.
    qkv = pallas_linear(x.reshape(B * N, C), params["w_qkv"], params["b_qkv"])
    qkv = qkv.reshape(B, N, 3 * C)

    # pack the four LayerNorm affine vectors into one sublane-aligned (8, D) buffer
    ln_pack = (jnp.zeros((8, head_dim), jnp.float32)
               .at[0].set(params["q_norm_gamma"])
               .at[1].set(params["q_norm_beta"])
               .at[2].set(params["k_norm_gamma"])
               .at[3].set(params["k_norm_beta"]))

    out, saved_attn = pallas_attention(
        qkv, ln_pack, num_heads=num_heads, head_dim=head_dim, scale=scale)

    # out is already in merged-head (B, N, C) layout; output projection.
    out = pallas_linear(out.reshape(B * N, C), params["w_proj"], params["b_proj"])
    return out.reshape(B, N, C), saved_attn


# ----------------------------------------------------------------------------
# Pure-JAX reference (f32) for validation.
# ----------------------------------------------------------------------------
def reference_forward(x, params, num_heads, eps=1e-6):
    B, N, C = x.shape
    D = C // num_heads
    scale = D ** -0.5
    qkv = x.reshape(B * N, C) @ params["w_qkv"] + params["b_qkv"]
    qkv = qkv.reshape(B, N, 3, num_heads, D).transpose(2, 0, 3, 1, 4)
    q, k, v = qkv[0], qkv[1], qkv[2]

    def ln(t, g, b):
        mu = t.mean(-1, keepdims=True)
        var = ((t - mu) ** 2).mean(-1, keepdims=True)
        return (t - mu) / jnp.sqrt(var + eps) * g + b

    q = ln(q, params["q_norm_gamma"], params["q_norm_beta"]) * scale
    k = ln(k, params["k_norm_gamma"], params["k_norm_beta"])
    s = jnp.einsum("bhnd,bhmd->bhnm", q, k)
    attn = jax.nn.softmax(s, axis=-1)
    o = jnp.einsum("bhnm,bhmd->bhnd", attn, v)
    o = o.transpose(0, 2, 1, 3).reshape(B * N, C)
    o = o @ params["w_proj"] + params["b_proj"]
    return o.reshape(B, N, C), attn


if __name__ == "__main__":
    B, N, C, H = 2, 8, 32, 4          # batch, tokens, channels, heads
    D = C // H

    key = jax.random.PRNGKey(0)
    kx, k1, k2, k3, k4 = jax.random.split(key, 5)

    x = jax.random.normal(kx, (B, N, C), dtype=jnp.float32)

    params = {
        # stored already transposed for y = x @ w + b  (w: (in, out))
        "w_qkv": 0.05 * jax.random.normal(k1, (C, 3 * C), dtype=jnp.float32),
        "b_qkv": 0.01 * jax.random.normal(k2, (3 * C,), dtype=jnp.float32),
        "w_proj": 0.05 * jax.random.normal(k3, (C, C), dtype=jnp.float32),
        "b_proj": 0.01 * jax.random.normal(k4, (C,), dtype=jnp.float32),
        # q_norm / k_norm LayerNorm(head_dim) affine params
        "q_norm_gamma": jnp.ones((D,), jnp.float32),
        "q_norm_beta": jnp.zeros((D,), jnp.float32),
        "k_norm_gamma": jnp.ones((D,), jnp.float32),
        "k_norm_beta": jnp.zeros((D,), jnp.float32),
    }

    out, saved_attn = extractable_attention_forward(x, params, num_heads=H)
    out = jax.block_until_ready(out)
    saved_attn = jax.block_until_ready(saved_attn)

    ref_out, ref_attn = reference_forward(x, params, num_heads=H)
    assert out.shape == (B, N, C) and saved_attn.shape == (B, H, N, N)
    # bf16 MXU inputs (f32 accumulate) -> tolerances reflect bf16 rounding (~4e-3 rel).
    assert jnp.allclose(out, ref_out, atol=2e-2, rtol=2e-2), \
        float(jnp.max(jnp.abs(out - ref_out)))
    assert jnp.allclose(saved_attn, ref_attn, atol=1e-2, rtol=2e-2), \
        float(jnp.max(jnp.abs(saved_attn - ref_attn)))

    print("KERNEL_OK")
</pallas_src>

<mosaic_0001>
module attributes {stable_mosaic.version = 11 : i64} {
  func.func @_linear_kernel(%arg0: i32, %arg1: i32, %arg2: memref<16x32xf32, #tpu.memory_space<vmem>>, %arg3: memref<32x96xf32, #tpu.memory_space<vmem>>, %arg4: memref<1x96xf32, #tpu.memory_space<vmem>>, %arg5: memref<16x96xf32, #tpu.memory_space<vmem>>) attributes {dimension_semantics = [#tpu.dimension_semantics<parallel>, #tpu.dimension_semantics<parallel>], iteration_bounds = array<i64: 1, 1>, scalar_prefetch = 0 : i64, scratch_operands = 0 : i64, tpu.core_type = #tpu.core_type<tc>, window_params = [{transform_indices = @transform_0, window_bounds = array<i64: 16, 32>}, {transform_indices = @transform_1, window_bounds = array<i64: 32, 96>}, {transform_indices = @transform_2, window_bounds = array<i64: 1, 96>}, {transform_indices = @transform_3, window_bounds = array<i64: 16, 96>}]} {
    %c0 = arith.constant 0 : index
    %c0_0 = arith.constant 0 : index
    %0 = vector.load %arg2[%c0, %c0_0] : memref<16x32xf32, #tpu.memory_space<vmem>>, vector<16x32xf32>
    %1 = arith.truncf %0 : vector<16x32xf32> to vector<16x32xbf16>
    %c0_1 = arith.constant 0 : index
    %c0_2 = arith.constant 0 : index
    %2 = vector.load %arg3[%c0_1, %c0_2] : memref<32x96xf32, #tpu.memory_space<vmem>>, vector<32x96xf32>
    %3 = arith.truncf %2 : vector<32x96xf32> to vector<32x96xbf16>
    %cst = arith.constant dense<0.000000e+00> : vector<16x96xf32>
    %4 = tpu.matmul %1, %3, %cst {dimension_numbers = #tpu.dot_dimension_numbers<[1], [0], [0], [1], [0, 0, 1, 1], [], []>} : vector<16x32xbf16>, vector<32x96xbf16>, vector<16x96xf32> -> vector<16x96xf32>
    %c0_3 = arith.constant 0 : index
    %c0_4 = arith.constant 0 : index
    %5 = vector.load %arg4[%c0_3, %c0_4] : memref<1x96xf32, #tpu.memory_space<vmem>>, vector<1x96xf32>
    %6 = vector.broadcast %5 : vector<1x96xf32> to vector<16x96xf32>
    %7 = arith.addf %4, %6 : vector<16x96xf32>
    %c0_5 = arith.constant 0 : index
    %c0_6 = arith.constant 0 : index
    %8 = vector.load %arg5[%c0_5, %c0_6] : memref<16x96xf32, #tpu.memory_space<vmem>>, vector<16x96xf32>
    tpu.vector_store %arg5[%c0_5, %c0_6], %7 {strides = array<i32>} : memref<16x96xf32, #tpu.memory_space<vmem>>, vector<16x96xf32>,
    return
  }
  func.func @transform_0(%arg0: i32, %arg1: i32) -> (i32, i32) {
    %c0_i32 = arith.constant 0 : i32
    %c0_i32_0 = arith.constant 0 : i32
    return %arg0, %c0_i32 : i32, i32
  }
  func.func @transform_1(%arg0: i32, %arg1: i32) -> (i32, i32) {
    %c0_i32 = arith.constant 0 : i32
    %c0_i32_0 = arith.constant 0 : i32
    return %c0_i32, %arg1 : i32, i32
  }
  func.func @transform_2(%arg0: i32, %arg1: i32) -> (i32, i32) {
    %c0_i32 = arith.constant 0 : i32
    %c0_i32_0 = arith.constant 0 : i32
    return %c0_i32, %arg1 : i32, i32
  }
  func.func @transform_3(%arg0: i32, %arg1: i32) -> (i32, i32) {
    %c0_i32 = arith.constant 0 : i32
    return %arg0, %arg1 : i32, i32
  }
}

</mosaic_0001>

<llo_original>
// kernel: tpu_custom_call.1
$region0: #{tpu_custom_call.1}
  #allocation0 [shape = 'u32[]', space=smem, size = 0x4, offset = 0x4, fixed_abs, tag = 'smem constant byte address 0x4 - core index']
  #allocation1 [shape = 'u32[72,128]{1,0:T(1,128)}', space=vmem, size = 0x9000, scoped, tag = 'internal scratch']
  %s0 = inlined_call_operand.hbm [shape: f32[16,32], index: 0, kind: input, shape index: {}]
  %s1 = inlined_call_operand.hbm [shape: f32[32,96], index: 1, kind: input, shape index: {}]
  %s2 = inlined_call_operand.vmem [shape: f32[1,96], index: 2, kind: input, shape index: {}]
  %s3 = inlined_call_operand.hbm [shape: f32[16,96], index: 3, kind: output, shape index: {}]
  %s4 = sld [smem:[#allocation0]]
  $region30: #{tpu_custom_call.1} parent=0
    _
  %s6 = ssub.s32 1, %s4
  %s7 = scalar_select 0, %s6, %s4
  $region1: #{tpu_custom_call.1} parent=0
    #allocation2 [shape = 'u8[8192]{0}', space=vmem, size = 0x2000, scoped, tag = 'input window, operand 0, single buffered']
    #allocation3 [shape = 's32[1]{0}', space=sflag, size = 0x4, scoped, tag = 'scoped memory for tpu_custom_call.1']
    #allocation4 [shape = 's32[1]{0}', space=sflag, size = 0x4, scoped, tag = 'scoped memory for tpu_custom_call.1']
    #allocation5 [shape = 'u8[16384]{0}', space=vmem, size = 0x4000, scoped, tag = 'input window, operand 1, single buffered']
    #allocation6 [shape = 's32[1]{0}', space=sflag, size = 0x4, scoped, tag = 'scoped memory for tpu_custom_call.1']
    #allocation7 [shape = 'u8[8192]{0}', space=vmem, size = 0x2000, scoped, tag = 'output window, operand 0, single buffered']
    %8 = vsyncpa [#allocation3], 0
    %9 = vsyncpa [#allocation6], 0
    %10 = vsyncpa [#allocation4], 0
    // Predicated region
    $region2: #{tpu_custom_call.1} parent=1 // pred_check
      _
    $region3: #{tpu_custom_call.1} parent=1 // pred_check_branch
      %12 = sbr.rel (0) target = $region5
    $region4: #{tpu_custom_call.1} parent=1 // pred_region
      %14 = vsyncadd [#allocation3], 0
      %s15 = sshll.u32 %s0, 4
      %s16 = int_to_ptr.hbm [resolvable:$true] %s15
      %s17 = sshll.u32 [#allocation2], 4
      %s18 = int_to_ptr.vmem [resolvable:$true] %s17
      %23 = dma.hbm_to_vmem [thread:$0]  %s16, 256, %s18, [#allocation3], 128, 128, 8
    $region5: #{tpu_custom_call.1} parent=1 // pred_fallthru
      _
    // Predicated region
    $region6: #{tpu_custom_call.1} parent=1 // pred_check
      _
    $region7: #{tpu_custom_call.1} parent=1 // pred_check_branch
      %25 = sbr.rel (0) target = $region9
    $region8: #{tpu_custom_call.1} parent=1 // pred_region
      %27 = vsyncadd [#allocation6], 0
      %s28 = sshll.u32 %s1, 4
      %s29 = int_to_ptr.hbm [resolvable:$true] %s28
      %s30 = sshll.u32 [#allocation5], 4
      %s31 = int_to_ptr.vmem [resolvable:$true] %s30
      %36 = dma.hbm_to_vmem [thread:$0]  %s29, 512, %s31, [#allocation6], 128, 128, 8
    $region9: #{tpu_custom_call.1} parent=1 // pred_fallthru
      _
    // Predicated region
    $region10: #{tpu_custom_call.1} parent=1 // pred_check
      _
    $region11: #{tpu_custom_call.1} parent=1 // pred_check_branch
      %38 = sbr.rel (0) target = $region13
    $region12: #{tpu_custom_call.1} parent=1 // pred_region
      _
    $region13: #{tpu_custom_call.1} parent=1 // pred_fallthru
      _
    // Predicated region
    $region14: #{tpu_custom_call.1} parent=1 // pred_check
      _
    $region15: #{tpu_custom_call.1} parent=1 // pred_check_branch
      %40 = sbr.rel (0) target = $region17
    $region16: #{tpu_custom_call.1} parent=1 // pred_region
      %42 = dma.done [#allocation3], 256
    $region17: #{tpu_custom_call.1} parent=1 // pred_fallthru
      _
    // Predicated region
    $region18: #{tpu_custom_call.1} parent=1 // pred_check
      _
    $region19: #{tpu_custom_call.1} parent=1 // pred_check_branch
      %44 = sbr.rel (0) target = $region21
    $region20: #{tpu_custom_call.1} parent=1 // pred_region
      %46 = dma.done [#allocation6], 512
    $region21: #{tpu_custom_call.1} parent=1 // pred_fallthru
      _
    %v48 = vld [vmem:[#allocation2] sm:$0xff]
    %v49 = vld [vmem:[#allocation2 + $0x8] sm:$0xff]
    %v50 = vpack.c.bf16 %v49, %v48
    %v51 = vld [vmem:[#allocation5] sm:$0xff]
    %v52 = vld [vmem:[#allocation5 + $0x8] sm:$0xff]
    %v53 = vld [vmem:[#allocation5 + $0x10] sm:$0xff]
    %v54 = vld [vmem:[#allocation5 + $0x18] sm:$0xff]
    %v55 = vpack.c.bf16 %v52, %v51
    %v56 = vpack.c.bf16 %v54, %v53
    %v57 = vld [vmem:[%s2] sm:$0x1]
    %v59 = vperm.slane %v57, 0
    %vm61 = vcmask 261120
    %v63 = vsel %vm61, %v50, 0
    %65 = vmatpush.bf16.msra.mxu0 0
    %66 = vmatpush.bf16.msra.mxu0 0
    %67 = vmatpush.bf16.msra.mxu0 0
    %68 = vmatpush.bf16.msra.mxu0 0
    %69 = vmatpush.bf16.msra.mxu0 0
    %70 = vmatpush.bf16.msra.mxu0 0
    %71 = vmatpush.bf16.msra.mxu0 %v56
    %72 = vmatpush.bf16.msra.mxu0 %v55
    %73 = vmatmul.bf16.gmra.mxu0 %v63
    %v74 = vpop.f32.mrf.mxu0
    %v75 = vadd.f32 %v59, %v74
    %v76 = vpop.f32.mrf.mxu0
    %v77 = vadd.f32 %v59, %v76
    %78 = vdwg.mxu0
    %vm79 = vcmask 785408
    %80 = vst.msk [vmem:[#allocation7] sm:$0xff] %vm79, %v75
    %81 = vst.msk [vmem:[#allocation7 + $0x8] sm:$0xff] %vm79, %v77
    // Predicated region
    $region22: #{tpu_custom_call.1} parent=1 // pred_check
      _
    $region23: #{tpu_custom_call.1} parent=1 // pred_check_branch
      %83 = sbr.rel (0) target = $region25
    $region24: #{tpu_custom_call.1} parent=1 // pred_region
      %85 = vsyncadd [#allocation4], 0
      %s86 = sshll.u32 [#allocation7], 4
      %s87 = int_to_ptr.vmem [resolvable:$true] %s86
      %s88 = sshll.u32 %s3, 4
      %s89 = int_to_ptr.hbm [resolvable:$true] %s88
      %94 = dma.vmem_to_hbm [thread:$0]  %s87, 256, %s89, [#allocation4], 128, 128, 8
    $region25: #{tpu_custom_call.1} parent=1 // pred_fallthru
      _
    // Predicated region
    $region26: #{tpu_custom_call.1} parent=1 // pred_check
      _
    $region27: #{tpu_custom_call.1} parent=1 // pred_check_branch
      %96 = sbr.rel (0) target = $region29
    $region28: #{tpu_custom_call.1} parent=1 // pred_region
      %98 = dma.done [#allocation4], 256
    $region29: #{tpu_custom_call.1} parent=1 // pred_fallthru
      _
    %99 = vsyncpa [#allocation3], 1
    %100 = vsyncpa [#allocation6], 1
    %101 = vsyncpa [#allocation4], 1

</llo_original>
